<compile_context>
chip_gen: v6e
topology: v6e:2x2x1
jax: 0.10.0
libtpu: 0.0.40
codegen_flags: <defaults>
</compile_context>

<pallas_src>
import jax
import jax.numpy as jnp
from jax.experimental import pallas as pl
from jax.experimental.pallas import tpu as pltpu


def _round_up(n, m):
    return ((n + m - 1) // m) * m


def _sigmoid(x):
    # sigmoid(x) == 0.5 * tanh(0.5 * x) + 0.5 : one EUP op per element instead
    # of exp + divide/reciprocal (halves EUP pressure; biggest win on v5e).
    return 0.5 * jnp.tanh(0.5 * x) + 0.5


def lstm_seq_kernel(x_ref, h0_ref, c0_ref, w_ih_ref, w_hh_ref, b_g_ref,
                    w_d_ref, b_d_ref, logits_ref, h_ref, c_ref):
    """One (batch_tile, timestep) grid point of the fused LSTMCell + Linear."""
    H = h_ref.shape[-1]
    t = pl.program_id(1)

    # h/c are carried across the time axis in the VMEM-resident output blocks:
    # their index_map depends only on the batch-tile index, so they never
    # round-trip through HBM between timesteps.
    @pl.when(t == 0)
    def _():
        h_ref[...] = h0_ref[...]
        c_ref[...] = c0_ref[...]

    x = x_ref[0]                 # (tm, I)  f32 input for this timestep
    h = h_ref[...]               # (tm, H)  f32 carried hidden state
    c = c_ref[...]               # (tm, H)  f32 carried cell state
    cd = w_ih_ref.dtype          # bf16 MXU compute dtype

    # Gate pre-activations: two bf16 MXU dots, f32 accumulation.
    gates = (jnp.dot(x.astype(cd), w_ih_ref[...],
                     preferred_element_type=jnp.float32)
             + jnp.dot(h.astype(cd), w_hh_ref[...],
                       preferred_element_type=jnp.float32)
             + b_g_ref[...])

    # PyTorch LSTMCell gate order: i, f, g, o.
    # TODO(synk): if H is ever not a multiple of 128, pad each gate's width to
    # a 128 multiple in prepare_params so these slices stay lane-aligned.
    i_g = _sigmoid(gates[:, 0 * H:1 * H])
    f_g = _sigmoid(gates[:, 1 * H:2 * H])
    g_g = jnp.tanh(gates[:, 2 * H:3 * H])
    o_g = _sigmoid(gates[:, 3 * H:4 * H])

    c_new = f_g * c + i_g * g_g
    h_new = o_g * jnp.tanh(c_new)

    # Dropout(p=0.1) in eval mode == identity.
    # TODO(synk): training-mode dropout would need pltpu.prng_seed/prng_random_bits.
    logits = (jnp.dot(h_new.astype(cd), w_d_ref[...],
                      preferred_element_type=jnp.float32) + b_d_ref[...])

    logits_ref[0, :, :] = logits.astype(logits_ref.dtype)
    h_ref[...] = h_new
    c_ref[...] = c_new


def prepare_params(params, *, compute_dtype=jnp.bfloat16):
    """One-time parameter packing (transposes, bias folding, padding, bf16 cast)."""
    four_h, in_size = params["w_ih"].shape
    hidden = four_h // 4
    out_size = params["w_dense"].shape[0]
    out_pad = _round_up(out_size, 128)

    w_ih_t = params["w_ih"].T.astype(compute_dtype)                     # (I, 4H)
    w_hh_t = params["w_hh"].T.astype(compute_dtype)                     # (H, 4H)
    b_gates = (params["b_ih"] + params["b_hh"]).astype(jnp.float32)
    b_gates = b_gates.reshape(1, 4 * hidden)                            # (1, 4H)
    w_dense = jnp.pad(params["w_dense"].T,
                      ((0, 0), (0, out_pad - out_size))).astype(compute_dtype)  # (H, Opad)
    b_dense = jnp.pad(params["b_dense"],
                      (0, out_pad - out_size)).astype(jnp.float32).reshape(1, out_pad)

    return {
        "w_ih_t": w_ih_t, "w_hh_t": w_hh_t, "b_gates": b_gates,
        "w_dense": w_dense, "b_dense": b_dense,
        "input_size": in_size, "hidden_size": hidden, "output_size": out_size,
    }


def rnn_cell_sequence(xs, hx, cx, prep, *, batch_tile=256):
    """Run the LSTMCell + dense over a whole sequence in ONE pallas_call.

    xs: (T, B, I).  Returns (logits: (T, B, O), h: (B, H), c: (B, H)).
    """
    T, B, I = xs.shape
    H = hx.shape[1]
    G = 4 * H
    O = prep["output_size"]
    O_pad = prep["w_dense"].shape[1]

    # Batch tiling: multiple of 8 sublanes; with big batches keep >= 2 tiles so
    # v7x megacore (batch axis marked "parallel") has something to shard.
    b8 = _round_up(B, 8)
    tm = min(_round_up(batch_tile, 8), b8)
    if B >= 512:
        tm = min(tm, _round_up(pl.cdiv(b8, 2), 8))
    B_pad = _round_up(B, tm)

    if B_pad != B:
        xs = jnp.pad(xs, ((0, 0), (0, B_pad - B), (0, 0)))
        hx = jnp.pad(hx, ((0, B_pad - B), (0, 0)))
        cx = jnp.pad(cx, ((0, B_pad - B), (0, 0)))

    grid = (B_pad // tm, T)

    def resident(rows, cols):
        # Same block for every grid step -> VMEM-resident, DMA'd once.
        return pl.BlockSpec((rows, cols), lambda b, t: (0, 0))

    def state(cols):
        # Depends only on the batch-tile index -> resident across the t sweep.
        return pl.BlockSpec((tm, cols), lambda b, t: (b, 0))

    # TODO(synk): single-buffer the resident weight specs (pipeline_mode=
    # pl.Buffered(1)) to halve weight VMEM on v7x's 64 MiB VMEM for large H.
    logits_pad, h_new, c_new = pl.pallas_call(
        lstm_seq_kernel,
        out_shape=(
            jax.ShapeDtypeStruct((T, B_pad, O_pad), jnp.float32),
            jax.ShapeDtypeStruct((B_pad, H), jnp.float32),
            jax.ShapeDtypeStruct((B_pad, H), jnp.float32),
        ),
        grid=grid,
        in_specs=[
            pl.BlockSpec((1, tm, I), lambda b, t: (t, b, 0)),   # x_t (streamed)
            state(H),                                           # h0
            state(H),                                           # c0
            resident(I, G),                                     # w_ih^T      (bf16)
            resident(H, G),                                     # w_hh^T      (bf16)
            resident(1, G),                                     # b_ih + b_hh (f32)
            resident(H, O_pad),                                 # w_dense^T   (bf16, padded)
            resident(1, O_pad),                                 # b_dense     (f32, padded)
        ],
        out_specs=(
            pl.BlockSpec((1, tm, O_pad), lambda b, t: (t, b, 0)),  # logits_t (lane-dense)
            state(H),                                              # h carried / final
            state(H),                                              # c carried / final
        ),
        compiler_params=pltpu.CompilerParams(
            # Batch tiles are independent (v7x: shard over 2 TCs); the time
            # axis is a true sequential recurrence.
            dimension_semantics=("parallel", "arbitrary"),
        ),
    )(xs, hx, cx, prep["w_ih_t"], prep["w_hh_t"], prep["b_gates"],
      prep["w_dense"], prep["b_dense"])

    return logits_pad[:, :B, :O], h_new[:B], c_new[:B]


def rnn_cell_forward(x, hx, cx, prep, *, batch_tile=256):
    """Pallas implementation of RNNCellModel.forward (single timestep)."""
    logits_seq, h_new, c_new = rnn_cell_sequence(x[None], hx, cx, prep,
                                                 batch_tile=batch_tile)
    return logits_seq[0], h_new, c_new


def make_params(key, input_size, hidden_size, output_size):
    ks = jax.random.split(key, 6)
    s = 1.0 / jnp.sqrt(hidden_size)
    return {
        "w_ih": jax.random.uniform(ks[0], (4 * hidden_size, input_size),
                                   jnp.float32, -s, s),
        "w_hh": jax.random.uniform(ks[1], (4 * hidden_size, hidden_size),
                                   jnp.float32, -s, s),
        "b_ih": jax.random.uniform(ks[2], (4 * hidden_size,),
                                   jnp.float32, -s, s),
        "b_hh": jax.random.uniform(ks[3], (4 * hidden_size,),
                                   jnp.float32, -s, s),
        "w_dense": jax.random.uniform(ks[4], (output_size, hidden_size),
                                      jnp.float32, -s, s),
        "b_dense": jax.random.uniform(ks[5], (output_size,),
                                      jnp.float32, -s, s),
    }


def reference_forward(x, hx, cx, p):
    gates = x @ p["w_ih"].T + p["b_ih"] + hx @ p["w_hh"].T + p["b_hh"]
    H = hx.shape[1]
    i = jax.nn.sigmoid(gates[:, 0 * H:1 * H])
    f = jax.nn.sigmoid(gates[:, 1 * H:2 * H])
    g = jnp.tanh(gates[:, 2 * H:3 * H])
    o = jax.nn.sigmoid(gates[:, 3 * H:4 * H])
    c_new = f * cx + i * g
    h_new = o * jnp.tanh(c_new)
    logits = h_new @ p["w_dense"].T + p["b_dense"]
    return logits, h_new, c_new


def reference_sequence(xs, hx, cx, p):
    logits_all = []
    for t in range(xs.shape[0]):
        logits, hx, cx = reference_forward(xs[t], hx, cx, p)
        logits_all.append(logits)
    return jnp.stack(logits_all, axis=0), hx, cx


if __name__ == "__main__":
    batch, input_size, hidden_size, output_size = 8, 32, 128, 32
    seq_len = 6

    key = jax.random.PRNGKey(0)
    k_x, k_h, k_c, k_p, k_seq = jax.random.split(key, 5)

    x = jax.random.normal(k_x, (batch, input_size), jnp.float32)
    hx = jax.random.normal(k_h, (batch, hidden_size), jnp.float32)
    cx = jax.random.normal(k_c, (batch, hidden_size), jnp.float32)
    xs = jax.random.normal(k_seq, (seq_len, batch, input_size), jnp.float32)

    params = make_params(k_p, input_size, hidden_size, output_size)
    prep = prepare_params(params)          # one-time packing (hoisted glue)

    # --- single timestep: the module's forward() contract ---
    logits, h_new, c_new = jax.block_until_ready(
        rnn_cell_forward(x, hx, cx, prep))

    assert logits.shape == (batch, output_size)
    assert h_new.shape == (batch, hidden_size)
    assert c_new.shape == (batch, hidden_size)

    ref_logits, ref_h, ref_c = reference_forward(x, hx, cx, params)
    assert jnp.allclose(logits, ref_logits, atol=3e-2, rtol=3e-2)
    assert jnp.allclose(h_new, ref_h, atol=3e-2, rtol=3e-2)
    assert jnp.allclose(c_new, ref_c, atol=3e-2, rtol=3e-2)

    # --- fused whole-sequence driver: time loop inside ONE pallas_call ---
    logits_seq, h_T, c_T = jax.block_until_ready(
        rnn_cell_sequence(xs, hx, cx, prep))
    ref_ls, ref_hT, ref_cT = reference_sequence(xs, hx, cx, params)
    assert logits_seq.shape == (seq_len, batch, output_size)
    assert jnp.allclose(logits_seq, ref_ls, atol=5e-2, rtol=5e-2)
    assert jnp.allclose(h_T, ref_hT, atol=5e-2, rtol=5e-2)
    assert jnp.allclose(c_T, ref_cT, atol=5e-2, rtol=5e-2)

    print("KERNEL_OK")
</pallas_src>

<mosaic_0001>
module attributes {stable_mosaic.version = 11 : i64} {
  func.func @lstm_seq_kernel(%arg0: i32, %arg1: i32, %arg2: memref<1x8x32xf32, #tpu.memory_space<vmem>>, %arg3: memref<8x128xf32, #tpu.memory_space<vmem>>, %arg4: memref<8x128xf32, #tpu.memory_space<vmem>>, %arg5: memref<32x512xbf16, #tpu.memory_space<vmem>>, %arg6: memref<128x512xbf16, #tpu.memory_space<vmem>>, %arg7: memref<1x512xf32, #tpu.memory_space<vmem>>, %arg8: memref<128x128xbf16, #tpu.memory_space<vmem>>, %arg9: memref<1x128xf32, #tpu.memory_space<vmem>>, %arg10: memref<1x8x128xf32, #tpu.memory_space<vmem>>, %arg11: memref<8x128xf32, #tpu.memory_space<vmem>>, %arg12: memref<8x128xf32, #tpu.memory_space<vmem>>) attributes {dimension_semantics = [#tpu.dimension_semantics<parallel>, #tpu.dimension_semantics<arbitrary>], iteration_bounds = array<i64: 1, 1>, scalar_prefetch = 0 : i64, scratch_operands = 0 : i64, tpu.core_type = #tpu.core_type<tc>, window_params = [{transform_indices = @transform_0, window_bounds = array<i64: 1, 8, 32>}, {transform_indices = @transform_1, window_bounds = array<i64: 8, 128>}, {transform_indices = @transform_2, window_bounds = array<i64: 8, 128>}, {pipeline_mode = #tpu.pipeline_mode<synchronous>, transform_indices = @transform_3, window_bounds = array<i64: 32, 512>}, {pipeline_mode = #tpu.pipeline_mode<synchronous>, transform_indices = @transform_4, window_bounds = array<i64: 128, 512>}, {pipeline_mode = #tpu.pipeline_mode<synchronous>, transform_indices = @transform_5, window_bounds = array<i64: 1, 512>}, {pipeline_mode = #tpu.pipeline_mode<synchronous>, transform_indices = @transform_6, window_bounds = array<i64: 128, 128>}, {pipeline_mode = #tpu.pipeline_mode<synchronous>, transform_indices = @transform_7, window_bounds = array<i64: 1, 128>}, {transform_indices = @transform_8, window_bounds = array<i64: 1, 8, 128>}, {transform_indices = @transform_9, window_bounds = array<i64: 8, 128>}, {transform_indices = @transform_10, window_bounds = array<i64: 8, 128>}]} {
    %c0_i32 = arith.constant 0 : i32
    %0 = arith.cmpi eq, %arg1, %c0_i32 : i32
    %1 = arith.extui %0 : i1 to i32
    %c0_i32_0 = arith.constant 0 : i32
    %2 = arith.cmpi ne, %1, %c0_i32_0 : i32
    scf.if %2 {
      %c0_35 = arith.constant 0 : index
      %c0_36 = arith.constant 0 : index
      %59 = vector.load %arg3[%c0_35, %c0_36] : memref<8x128xf32, #tpu.memory_space<vmem>>, vector<8x128xf32>
      %c0_37 = arith.constant 0 : index
      %c0_38 = arith.constant 0 : index
      %60 = vector.load %arg11[%c0_37, %c0_38] : memref<8x128xf32, #tpu.memory_space<vmem>>, vector<8x128xf32>
      tpu.vector_store %arg11[%c0_37, %c0_38], %59 {strides = array<i32>} : memref<8x128xf32, #tpu.memory_space<vmem>>, vector<8x128xf32>,
      %c0_39 = arith.constant 0 : index
      %c0_40 = arith.constant 0 : index
      %61 = vector.load %arg4[%c0_39, %c0_40] : memref<8x128xf32, #tpu.memory_space<vmem>>, vector<8x128xf32>
      %c0_41 = arith.constant 0 : index
      %c0_42 = arith.constant 0 : index
      %62 = vector.load %arg12[%c0_41, %c0_42] : memref<8x128xf32, #tpu.memory_space<vmem>>, vector<8x128xf32>
      tpu.vector_store %arg12[%c0_41, %c0_42], %61 {strides = array<i32>} : memref<8x128xf32, #tpu.memory_space<vmem>>, vector<8x128xf32>,
    } else {
    }
    %c0 = arith.constant 0 : index
    %c0_1 = arith.constant 0 : index
    %c0_2 = arith.constant 0 : index
    %3 = vector.load %arg2[%c0, %c0_1, %c0_2] : memref<1x8x32xf32, #tpu.memory_space<vmem>>, vector<1x8x32xf32>
    %4 = vector.shape_cast %3 : vector<1x8x32xf32> to vector<8x32xf32>
    %c0_3 = arith.constant 0 : index
    %c0_4 = arith.constant 0 : index
    %5 = vector.load %arg11[%c0_3, %c0_4] : memref<8x128xf32, #tpu.memory_space<vmem>>, vector<8x128xf32>
    %c0_5 = arith.constant 0 : index
    %c0_6 = arith.constant 0 : index
    %6 = vector.load %arg12[%c0_5, %c0_6] : memref<8x128xf32, #tpu.memory_space<vmem>>, vector<8x128xf32>
    %7 = arith.truncf %4 : vector<8x32xf32> to vector<8x32xbf16>
    %c0_7 = arith.constant 0 : index
    %c0_8 = arith.constant 0 : index
    %8 = vector.load %arg5[%c0_7, %c0_8] : memref<32x512xbf16, #tpu.memory_space<vmem>>, vector<32x512xbf16>
    %cst = arith.constant dense<0.000000e+00> : vector<8x512xf32>
    %9 = tpu.matmul %7, %8, %cst {dimension_numbers = #tpu.dot_dimension_numbers<[1], [0], [0], [1], [0, 0, 1, 1], [], []>} : vector<8x32xbf16>, vector<32x512xbf16>, vector<8x512xf32> -> vector<8x512xf32>
    %10 = arith.truncf %5 : vector<8x128xf32> to vector<8x128xbf16>
    %c0_9 = arith.constant 0 : index
    %c0_10 = arith.constant 0 : index
    %11 = vector.load %arg6[%c0_9, %c0_10] : memref<128x512xbf16, #tpu.memory_space<vmem>>, vector<128x512xbf16>
    %cst_11 = arith.constant dense<0.000000e+00> : vector<8x512xf32>
    %12 = tpu.matmul %10, %11, %cst_11 {dimension_numbers = #tpu.dot_dimension_numbers<[1], [0], [0], [1], [0, 0, 1, 1], [], []>} : vector<8x128xbf16>, vector<128x512xbf16>, vector<8x512xf32> -> vector<8x512xf32>
    %13 = arith.addf %9, %12 : vector<8x512xf32>
    %c0_12 = arith.constant 0 : index
    %c0_13 = arith.constant 0 : index
    %14 = vector.load %arg7[%c0_12, %c0_13] : memref<1x512xf32, #tpu.memory_space<vmem>>, vector<1x512xf32>
    %15 = vector.broadcast %14 : vector<1x512xf32> to vector<8x512xf32>
    %16 = arith.addf %13, %15 : vector<8x512xf32>
    %17 = vector.extract_strided_slice %16 {offsets = [0, 0], sizes = [8, 128], strides = [1, 1]} : vector<8x512xf32> to vector<8x128xf32>
    %cst_14 = arith.constant 5.000000e-01 : f32
    %18 = vector.broadcast %cst_14 : f32 to vector<8x128xf32>
    %19 = arith.mulf %18, %17 : vector<8x128xf32>
    %20 = math.tanh %19 : vector<8x128xf32>
    %cst_15 = arith.constant 5.000000e-01 : f32
    %21 = vector.broadcast %cst_15 : f32 to vector<8x128xf32>
    %22 = arith.mulf %21, %20 : vector<8x128xf32>
    %cst_16 = arith.constant 5.000000e-01 : f32
    %23 = vector.broadcast %cst_16 : f32 to vector<8x128xf32>
    %24 = arith.addf %22, %23 : vector<8x128xf32>
    %25 = vector.extract_strided_slice %16 {offsets = [0, 128], sizes = [8, 128], strides = [1, 1]} : vector<8x512xf32> to vector<8x128xf32>
    %cst_17 = arith.constant 5.000000e-01 : f32
    %26 = vector.broadcast %cst_17 : f32 to vector<8x128xf32>
    %27 = arith.mulf %26, %25 : vector<8x128xf32>
    %28 = math.tanh %27 : vector<8x128xf32>
    %cst_18 = arith.constant 5.000000e-01 : f32
    %29 = vector.broadcast %cst_18 : f32 to vector<8x128xf32>
    %30 = arith.mulf %29, %28 : vector<8x128xf32>
    %cst_19 = arith.constant 5.000000e-01 : f32
    %31 = vector.broadcast %cst_19 : f32 to vector<8x128xf32>
    %32 = arith.addf %30, %31 : vector<8x128xf32>
    %33 = vector.extract_strided_slice %16 {offsets = [0, 256], sizes = [8, 128], strides = [1, 1]} : vector<8x512xf32> to vector<8x128xf32>
    %34 = math.tanh %33 : vector<8x128xf32>
    %35 = vector.extract_strided_slice %16 {offsets = [0, 384], sizes = [8, 128], strides = [1, 1]} : vector<8x512xf32> to vector<8x128xf32>
    %cst_20 = arith.constant 5.000000e-01 : f32
    %36 = vector.broadcast %cst_20 : f32 to vector<8x128xf32>
    %37 = arith.mulf %36, %35 : vector<8x128xf32>
    %38 = math.tanh %37 : vector<8x128xf32>
    %cst_21 = arith.constant 5.000000e-01 : f32
    %39 = vector.broadcast %cst_21 : f32 to vector<8x128xf32>
    %40 = arith.mulf %39, %38 : vector<8x128xf32>
    %cst_22 = arith.constant 5.000000e-01 : f32
    %41 = vector.broadcast %cst_22 : f32 to vector<8x128xf32>
    %42 = arith.addf %40, %41 : vector<8x128xf32>
    %43 = arith.mulf %32, %6 : vector<8x128xf32>
    %44 = arith.mulf %24, %34 : vector<8x128xf32>
    %45 = arith.addf %43, %44 : vector<8x128xf32>
    %46 = math.tanh %45 : vector<8x128xf32>
    %47 = arith.mulf %42, %46 : vector<8x128xf32>
    %48 = arith.truncf %47 : vector<8x128xf32> to vector<8x128xbf16>
    %c0_23 = arith.constant 0 : index
    %c0_24 = arith.constant 0 : index
    %49 = vector.load %arg8[%c0_23, %c0_24] : memref<128x128xbf16, #tpu.memory_space<vmem>>, vector<128x128xbf16>
    %cst_25 = arith.constant dense<0.000000e+00> : vector<8x128xf32>
    %50 = tpu.matmul %48, %49, %cst_25 {dimension_numbers = #tpu.dot_dimension_numbers<[1], [0], [0], [1], [0, 0, 1, 1], [], []>} : vector<8x128xbf16>, vector<128x128xbf16>, vector<8x128xf32> -> vector<8x128xf32>
    %c0_26 = arith.constant 0 : index
    %c0_27 = arith.constant 0 : index
    %51 = vector.load %arg9[%c0_26, %c0_27] : memref<1x128xf32, #tpu.memory_space<vmem>>, vector<1x128xf32>
    %52 = vector.broadcast %51 : vector<1x128xf32> to vector<8x128xf32>
    %53 = arith.addf %50, %52 : vector<8x128xf32>
    %c0_28 = arith.constant 0 : index
    %c0_29 = arith.constant 0 : index
    %c0_30 = arith.constant 0 : index
    %54 = vector.load %arg10[%c0_28, %c0_29, %c0_30] : memref<1x8x128xf32, #tpu.memory_space<vmem>>, vector<1x8x128xf32>
    %55 = vector.shape_cast %54 : vector<1x8x128xf32> to vector<8x128xf32>
    %56 = vector.shape_cast %53 : vector<8x128xf32> to vector<1x8x128xf32>
    tpu.vector_store %arg10[%c0_28, %c0_29, %c0_30], %56 {strides = array<i32>} : memref<1x8x128xf32, #tpu.memory_space<vmem>>, vector<1x8x128xf32>,
    %c0_31 = arith.constant 0 : index
    %c0_32 = arith.constant 0 : index
    %57 = vector.load %arg11[%c0_31, %c0_32] : memref<8x128xf32, #tpu.memory_space<vmem>>, vector<8x128xf32>
    tpu.vector_store %arg11[%c0_31, %c0_32], %47 {strides = array<i32>} : memref<8x128xf32, #tpu.memory_space<vmem>>, vector<8x128xf32>,
    %c0_33 = arith.constant 0 : index
    %c0_34 = arith.constant 0 : index
    %58 = vector.load %arg12[%c0_33, %c0_34] : memref<8x128xf32, #tpu.memory_space<vmem>>, vector<8x128xf32>
    tpu.vector_store %arg12[%c0_33, %c0_34], %45 {strides = array<i32>} : memref<8x128xf32, #tpu.memory_space<vmem>>, vector<8x128xf32>,
    return
  }
  func.func @transform_0(%arg0: i32, %arg1: i32) -> (i32, i32, i32) {
    %c0_i32 = arith.constant 0 : i32
    %c0_i32_0 = arith.constant 0 : i32
    return %arg1, %arg0, %c0_i32 : i32, i32, i32
  }
  func.func @transform_1(%arg0: i32, %arg1: i32) -> (i32, i32) {
    %c0_i32 = arith.constant 0 : i32
    %c0_i32_0 = arith.constant 0 : i32
    return %arg0, %c0_i32 : i32, i32
  }
  func.func @transform_2(%arg0: i32, %arg1: i32) -> (i32, i32) {
    %c0_i32 = arith.constant 0 : i32
    %c0_i32_0 = arith.constant 0 : i32
    return %arg0, %c0_i32 : i32, i32
  }
  func.func @transform_3(%arg0: i32, %arg1: i32) -> (i32, i32) {
    %c0_i32 = arith.constant 0 : i32
    %c0_i32_0 = arith.constant 0 : i32
    %c0_i32_1 = arith.constant 0 : i32
    return %c0_i32, %c0_i32_0 : i32, i32
  }
  func.func @transform_4(%arg0: i32, %arg1: i32) -> (i32, i32) {
    %c0_i32 = arith.constant 0 : i32
    %c0_i32_0 = arith.constant 0 : i32
    %c0_i32_1 = arith.constant 0 : i32
    return %c0_i32, %c0_i32_0 : i32, i32
  }
  func.func @transform_5(%arg0: i32, %arg1: i32) -> (i32, i32) {
    %c0_i32 = arith.constant 0 : i32
    %c0_i32_0 = arith.constant 0 : i32
    %c0_i32_1 = arith.constant 0 : i32
    return %c0_i32, %c0_i32_0 : i32, i32
  }
  func.func @transform_6(%arg0: i32, %arg1: i32) -> (i32, i32) {
    %c0_i32 = arith.constant 0 : i32
    %c0_i32_0 = arith.constant 0 : i32
    %c0_i32_1 = arith.constant 0 : i32
    return %c0_i32, %c0_i32_0 : i32, i32
  }
  func.func @transform_7(%arg0: i32, %arg1: i32) -> (i32, i32) {
    %c0_i32 = arith.constant 0 : i32
    %c0_i32_0 = arith.constant 0 : i32
    %c0_i32_1 = arith.constant 0 : i32
    return %c0_i32, %c0_i32_0 : i32, i32
  }
  func.func @transform_8(%arg0: i32, %arg1: i32) -> (i32, i32, i32) {
    %c0_i32 = arith.constant 0 : i32
    %c0_i32_0 = arith.constant 0 : i32
    return %arg1, %arg0, %c0_i32 : i32, i32, i32
  }
  func.func @transform_9(%arg0: i32, %arg1: i32) -> (i32, i32) {
    %c0_i32 = arith.constant 0 : i32
    %c0_i32_0 = arith.constant 0 : i32
    return %arg0, %c0_i32 : i32, i32
  }
  func.func @transform_10(%arg0: i32, %arg1: i32) -> (i32, i32) {
    %c0_i32 = arith.constant 0 : i32
    %c0_i32_0 = arith.constant 0 : i32
    return %arg0, %c0_i32 : i32, i32
  }
}

</mosaic_0001>

<llo_original>
// kernel: tpu_custom_call.1
$region0: #{tpu_custom_call.1}
  #allocation0 [shape = 'u32[]', space=smem, size = 0x4, offset = 0x4, fixed_abs, tag = 'smem constant byte address 0x4 - core index']
  #allocation1 [shape = 'u32[144,128]{1,0:T(1,128)}', space=vmem, size = 0x12000, scoped, tag = 'internal scratch']
  %s0 = inlined_call_operand.hbm [shape: f32[1,8,32], index: 0, kind: input, shape index: {}]
  %s1 = inlined_call_operand.hbm [shape: f32[8,128], index: 1, kind: input, shape index: {}]
  %s2 = inlined_call_operand.hbm [shape: f32[8,128], index: 2, kind: input, shape index: {}]
  %s3 = inlined_call_operand.hbm [shape: bf16[32,512], index: 3, kind: input, shape index: {}]
  %s4 = inlined_call_operand.hbm [shape: bf16[128,512], index: 4, kind: input, shape index: {}]
  %s5 = inlined_call_operand.vmem [shape: f32[1,512], index: 5, kind: input, shape index: {}]
  %s6 = inlined_call_operand.hbm [shape: bf16[128,128], index: 6, kind: input, shape index: {}]
  %s7 = inlined_call_operand.vmem [shape: f32[1,128], index: 7, kind: input, shape index: {}]
  %s8 = inlined_call_operand.hbm [shape: f32[1,8,128], index: 8, kind: output, shape index: {0}]
  %s9 = inlined_call_operand.hbm [shape: f32[8,128], index: 9, kind: output, shape index: {1}]
  %s10 = inlined_call_operand.hbm [shape: f32[8,128], index: 10, kind: output, shape index: {2}]
  %11 = xla_tuple %s8, %s9, %s10
  %s12 = sld [smem:[#allocation0]]
  $region86: #{tpu_custom_call.1} parent=0
    _
  %s14 = ssub.s32 1, %s12
  %s15 = scalar_select 0, %s14, %s12
  $region1: #{tpu_custom_call.1} parent=0
    #allocation2 [shape = 'u8[4096]{0}', space=vmem, size = 0x1000, scoped, tag = 'input window, operand 0, single buffered']
    #allocation3 [shape = 's32[1]{0}', space=sflag, size = 0x4, scoped, tag = 'scoped memory for tpu_custom_call.1']
    #allocation4 [shape = 's32[1]{0}', space=sflag, size = 0x4, scoped, tag = 'scoped memory for tpu_custom_call.1']
    #allocation5 [shape = 'u8[4096]{0}', space=vmem, size = 0x1000, scoped, tag = 'input window, operand 1, single buffered']
    #allocation6 [shape = 's32[1]{0}', space=sflag, size = 0x4, scoped, tag = 'scoped memory for tpu_custom_call.1']
    #allocation7 [shape = 'u8[4096]{0}', space=vmem, size = 0x1000, scoped, tag = 'input window, operand 2, single buffered']
    #allocation8 [shape = 'u8[32768]{0}', space=vmem, size = 0x8000, scoped, tag = 'input window, operand 3, single buffered']
    #allocation9 [shape = 's32[1]{0}', space=sflag, size = 0x4, scoped, tag = 'scoped memory for tpu_custom_call.1']
    #allocation10 [shape = 'u8[131072]{0}', space=vmem, size = 0x20000, scoped, tag = 'input window, operand 4, single buffered']
    #allocation11 [shape = 'u8[32768]{0}', space=vmem, size = 0x8000, scoped, tag = 'input window, operand 6, single buffered']
    #allocation12 [shape = 's32[1]{0}', space=sflag, size = 0x4, scoped, tag = 'scoped memory for tpu_custom_call.1']
    #allocation13 [shape = 'u8[4096]{0}', space=vmem, size = 0x1000, scoped, tag = 'output window, operand 0, single buffered']
    #allocation14 [shape = 'u8[4096]{0}', space=vmem, size = 0x1000, scoped, tag = 'output window, operand 1, single buffered']
    #allocation15 [shape = 's32[1]{0}', space=sflag, size = 0x4, scoped, tag = 'scoped memory for tpu_custom_call.1']
    #allocation16 [shape = 'u8[4096]{0}', space=vmem, size = 0x1000, scoped, tag = 'output window, operand 2, single buffered']
    %16 = vsyncpa [#allocation3], 0
    %17 = vsyncpa [#allocation6], 0
    %18 = vsyncpa [#allocation9], 0
    %19 = vsyncpa [#allocation12], 0
    %20 = vsyncpa [#allocation4], 0
    %21 = vsyncpa [#allocation15], 0
    // Predicated region
    $region2: #{tpu_custom_call.1} parent=1 // pred_check
      _
    $region3: #{tpu_custom_call.1} parent=1 // pred_check_branch
      %23 = sbr.rel (0) target = $region5
    $region4: #{tpu_custom_call.1} parent=1 // pred_region
      %s25 = ssub.s32 128, 128
      %26 = vsyncadd [#allocation3], %s25
      %s28 = sshll.u32 [#allocation2], 4
      %s29 = int_to_ptr.vmem [resolvable:$true] %s28
      %31 = dma.hbm_to_vmem [thread:$0]  %s0, 128, %s29, [#allocation3]
    $region5: #{tpu_custom_call.1} parent=1 // pred_fallthru
      _
    // Predicated region
    $region6: #{tpu_custom_call.1} parent=1 // pred_check
      _
    $region7: #{tpu_custom_call.1} parent=1 // pred_check_branch
      %33 = sbr.rel (0) target = $region9
    $region8: #{tpu_custom_call.1} parent=1 // pred_region
      %s35 = ssub.s32 128, 128
      %36 = vsyncadd [#allocation6], %s35
      %s38 = sshll.u32 [#allocation5], 4
      %s39 = int_to_ptr.vmem [resolvable:$true] %s38
      %41 = dma.hbm_to_vmem [thread:$0]  %s1, 128, %s39, [#allocation6]
    $region9: #{tpu_custom_call.1} parent=1 // pred_fallthru
      _
    // Predicated region
    $region10: #{tpu_custom_call.1} parent=1 // pred_check
      _
    $region11: #{tpu_custom_call.1} parent=1 // pred_check_branch
      %43 = sbr.rel (0) target = $region13
    $region12: #{tpu_custom_call.1} parent=1 // pred_region
      %s45 = ssub.s32 128, 128
      %46 = vsyncadd [#allocation6], %s45
      %s48 = sshll.u32 [#allocation7], 4
      %s49 = int_to_ptr.vmem [resolvable:$true] %s48
      %51 = dma.hbm_to_vmem [thread:$0]  %s2, 128, %s49, [#allocation6]
    $region13: #{tpu_custom_call.1} parent=1 // pred_fallthru
      _
    // Predicated region
    $region14: #{tpu_custom_call.1} parent=1 // pred_check
      _
    $region15: #{tpu_custom_call.1} parent=1 // pred_check_branch
      %53 = sbr.rel (0) target = $region17
    $region16: #{tpu_custom_call.1} parent=1 // pred_region
      %s55 = ssub.s32 1024, 1024
      %56 = vsyncadd [#allocation9], %s55
      %s57 = sshll.u32 [#allocation8], 4
      %s58 = int_to_ptr.vmem [resolvable:$true] %s57
      %63 = dma.hbm_to_vmem [thread:$0]  %s3, 1024, %s58, [#allocation9], 256, 256, 16
    $region17: #{tpu_custom_call.1} parent=1 // pred_fallthru
      _
    // Predicated region
    $region18: #{tpu_custom_call.1} parent=1 // pred_check
      _
    $region19: #{tpu_custom_call.1} parent=1 // pred_check_branch
      %65 = sbr.rel (0) target = $region21
    $region20: #{tpu_custom_call.1} parent=1 // pred_region
      %s67 = ssub.s32 4096, 4096
      %68 = vsyncadd [#allocation9], %s67
      %s69 = sshll.u32 [#allocation10], 4
      %s70 = int_to_ptr.vmem [resolvable:$true] %s69
      %75 = dma.hbm_to_vmem [thread:$0]  %s4, 4096, %s70, [#allocation9], 256, 256, 16
    $region21: #{tpu_custom_call.1} parent=1 // pred_fallthru
      _
    // Predicated region
    $region22: #{tpu_custom_call.1} parent=1 // pred_check
      _
    $region23: #{tpu_custom_call.1} parent=1 // pred_check_branch
      %77 = sbr.rel (0) target = $region25
    $region24: #{tpu_custom_call.1} parent=1 // pred_region
      _
    $region25: #{tpu_custom_call.1} parent=1 // pred_fallthru
      _
    // Predicated region
    $region26: #{tpu_custom_call.1} parent=1 // pred_check
      _
    $region27: #{tpu_custom_call.1} parent=1 // pred_check_branch
      %79 = sbr.rel (0) target = $region29
    $region28: #{tpu_custom_call.1} parent=1 // pred_region
      %s81 = ssub.s32 1024, 1024
      %82 = vsyncadd [#allocation12], %s81
      %s83 = sshll.u32 [#allocation11], 4
      %s84 = int_to_ptr.vmem [resolvable:$true] %s83
      %89 = dma.hbm_to_vmem [thread:$0]  %s6, 1024, %s84, [#allocation12], 64, 64, 4
    $region29: #{tpu_custom_call.1} parent=1 // pred_fallthru
      _
    // Predicated region
    $region30: #{tpu_custom_call.1} parent=1 // pred_check
      _
    $region31: #{tpu_custom_call.1} parent=1 // pred_check_branch
      %91 = sbr.rel (0) target = $region33
    $region32: #{tpu_custom_call.1} parent=1 // pred_region
      _
    $region33: #{tpu_custom_call.1} parent=1 // pred_fallthru
      _
    // Predicated region
    $region34: #{tpu_custom_call.1} parent=1 // pred_check
      _
    $region35: #{tpu_custom_call.1} parent=1 // pred_check_branch
      %93 = sbr.rel (0) target = $region37
    $region36: #{tpu_custom_call.1} parent=1 // pred_region
      %94 = dma.done [#allocation3], 128
    $region37: #{tpu_custom_call.1} parent=1 // pred_fallthru
      _
    // Predicated region
    $region38: #{tpu_custom_call.1} parent=1 // pred_check
      _
    $region39: #{tpu_custom_call.1} parent=1 // pred_check_branch
      %96 = sbr.rel (0) target = $region41
    $region40: #{tpu_custom_call.1} parent=1 // pred_region
      %97 = dma.done [#allocation6], 128
    $region41: #{tpu_custom_call.1} parent=1 // pred_fallthru
      _
    // Predicated region
    $region42: #{tpu_custom_call.1} parent=1 // pred_check
      _
    $region43: #{tpu_custom_call.1} parent=1 // pred_check_branch
      %99 = sbr.rel (0) target = $region45
    $region44: #{tpu_custom_call.1} parent=1 // pred_region
      %100 = dma.done [#allocation6], 128
    $region45: #{tpu_custom_call.1} parent=1 // pred_fallthru
      _
    // Predicated region
    $region46: #{tpu_custom_call.1} parent=1 // pred_check
      _
    $region47: #{tpu_custom_call.1} parent=1 // pred_check_branch
      %102 = sbr.rel (0) target = $region49
    $region48: #{tpu_custom_call.1} parent=1 // pred_region
      %103 = dma.done [#allocation9], 1024
    $region49: #{tpu_custom_call.1} parent=1 // pred_fallthru
      _
    // Predicated region
    $region50: #{tpu_custom_call.1} parent=1 // pred_check
      _
    $region51: #{tpu_custom_call.1} parent=1 // pred_check_branch
      %105 = sbr.rel (0) target = $region53
    $region52: #{tpu_custom_call.1} parent=1 // pred_region
      %106 = dma.done [#allocation9], 4096
    $region53: #{tpu_custom_call.1} parent=1 // pred_fallthru
      _
    // Predicated region
    $region54: #{tpu_custom_call.1} parent=1 // pred_check
      _
    $region55: #{tpu_custom_call.1} parent=1 // pred_check_branch
      %108 = sbr.rel (0) target = $region57
    $region56: #{tpu_custom_call.1} parent=1 // pred_region
      %109 = dma.done [#allocation12], 1024
    $region57: #{tpu_custom_call.1} parent=1 // pred_fallthru
      _
    %p111 = scmp.eq.s32.totalorder 0, 0
    // Predicated region
    $region58: #{tpu_custom_call.1} parent=1 // pred_check
      %p112 = pneg %p111
    $region59: #{tpu_custom_call.1} parent=1 // pred_check_branch
      %114 = sbr.rel (%p112) target = $region61
    $region60: #{tpu_custom_call.1} parent=1 // pred_region
      %v115 = vld [vmem:[#allocation5] sm:$0xff]
      %116 = vst [vmem:[#allocation14] sm:$0xff] %v115
      %v117 = vld [vmem:[#allocation7] sm:$0xff]
      %118 = vst [vmem:[#allocation16] sm:$0xff] %v117
    $region61: #{tpu_custom_call.1} parent=1 // pred_fallthru
      _
    %v119 = vld [vmem:[#allocation2] sm:$0xff]
    %v120 = vld [vmem:[#allocation14] sm:$0xff]
    %v121 = vld [vmem:[#allocation16] sm:$0xff]
    %v122 = vpack.c.bf16 %v119, %v119
    %v123 = vld [vmem:[#allocation8] sm:$0xff]
    %v124 = vld [vmem:[#allocation8 + $0x8] sm:$0xff]
    %v125 = vld [vmem:[#allocation8 + $0x10] sm:$0xff]
    %v126 = vld [vmem:[#allocation8 + $0x18] sm:$0xff]
    %v127 = vld [vmem:[#allocation8 + $0x20] sm:$0xff]
    %v128 = vld [vmem:[#allocation8 + $0x28] sm:$0xff]
    %v129 = vld [vmem:[#allocation8 + $0x30] sm:$0xff]
    %v130 = vld [vmem:[#allocation8 + $0x38] sm:$0xff]
    %v131 = vpack.c.bf16 %v120, %v120
    %v132 = vld [vmem:[#allocation10] sm:$0xff]
    %v133 = vld [vmem:[#allocation10 + $0x8] sm:$0xff]
    %v134 = vld [vmem:[#allocation10 + $0x10] sm:$0xff]
    %v135 = vld [vmem:[#allocation10 + $0x18] sm:$0xff]
    %v136 = vld [vmem:[#allocation10 + $0x20] sm:$0xff]
    %v137 = vld [vmem:[#allocation10 + $0x28] sm:$0xff]
    %v138 = vld [vmem:[#allocation10 + $0x30] sm:$0xff]
    %v139 = vld [vmem:[#allocation10 + $0x38] sm:$0xff]
    %v140 = vld [vmem:[#allocation10 + $0x40] sm:$0xff]
    %v141 = vld [vmem:[#allocation10 + $0x48] sm:$0xff]
    %v142 = vld [vmem:[#allocation10 + $0x50] sm:$0xff]
    %v143 = vld [vmem:[#allocation10 + $0x58] sm:$0xff]
    %v144 = vld [vmem:[#allocation10 + $0x60] sm:$0xff]
    %v145 = vld [vmem:[#allocation10 + $0x68] sm:$0xff]
    %v146 = vld [vmem:[#allocation10 + $0x70] sm:$0xff]
    %v147 = vld [vmem:[#allocation10 + $0x78] sm:$0xff]
    %v148 = vld [vmem:[#allocation10 + $0x80] sm:$0xff]
    %v149 = vld [vmem:[#allocation10 + $0x88] sm:$0xff]
    %v150 = vld [vmem:[#allocation10 + $0x90] sm:$0xff]
    %v151 = vld [vmem:[#allocation10 + $0x98] sm:$0xff]
    %v152 = vld [vmem:[#allocation10 + $0xa0] sm:$0xff]
    %v153 = vld [vmem:[#allocation10 + $0xa8] sm:$0xff]
    %v154 = vld [vmem:[#allocation10 + $0xb0] sm:$0xff]
    %v155 = vld [vmem:[#allocation10 + $0xb8] sm:$0xff]
    %v156 = vld [vmem:[#allocation10 + $0xc0] sm:$0xff]
    %v157 = vld [vmem:[#allocation10 + $0xc8] sm:$0xff]
    %v158 = vld [vmem:[#allocation10 + $0xd0] sm:$0xff]
    %v159 = vld [vmem:[#allocation10 + $0xd8] sm:$0xff]
    %v160 = vld [vmem:[#allocation10 + $0xe0] sm:$0xff]
    %v161 = vld [vmem:[#allocation10 + $0xe8] sm:$0xff]
    %v162 = vld [vmem:[#allocation10 + $0xf0] sm:$0xff]
    %v163 = vld [vmem:[#allocation10 + $0xf8] sm:$0xff]
    %v196 = vunpack.c.l.b16 %v132
    %v197 = vunpack.c.h.b16 %v132
    %v198 = vunpack.c.l.b16 %v133
    %v199 = vunpack.c.h.b16 %v133
    %v200 = vunpack.c.l.b16 %v134
    %v201 = vunpack.c.h.b16 %v134
    %v202 = vunpack.c.l.b16 %v135
    %v203 = vunpack.c.h.b16 %v135
    %v204 = vunpack.c.l.b16 %v136
    %v205 = vunpack.c.h.b16 %v136
    %v206 = vunpack.c.l.b16 %v137
    %v207 = vunpack.c.h.b16 %v137
    %v208 = vunpack.c.l.b16 %v138
    %v209 = vunpack.c.h.b16 %v138
    %v210 = vunpack.c.l.b16 %v139
    %v211 = vunpack.c.h.b16 %v139
    %v212 = vunpack.c.l.b16 %v140
    %v213 = vunpack.c.h.b16 %v140
    %v214 = vunpack.c.l.b16 %v141
    %v215 = vunpack.c.h.b16 %v141
    %v216 = vunpack.c.l.b16 %v142
    %v217 = vunpack.c.h.b16 %v142
    %v218 = vunpack.c.l.b16 %v143
    %v219 = vunpack.c.h.b16 %v143
    %v220 = vunpack.c.l.b16 %v144
    %v221 = vunpack.c.h.b16 %v144
    %v222 = vunpack.c.l.b16 %v145
    %v223 = vunpack.c.h.b16 %v145
    %v224 = vunpack.c.l.b16 %v146
    %v225 = vunpack.c.h.b16 %v146
    %v226 = vunpack.c.l.b16 %v147
    %v227 = vunpack.c.h.b16 %v147
    %v228 = vunpack.c.l.b16 %v148
    %v229 = vunpack.c.h.b16 %v148
    %v230 = vunpack.c.l.b16 %v149
    %v231 = vunpack.c.h.b16 %v149
    %v232 = vunpack.c.l.b16 %v150
    %v233 = vunpack.c.h.b16 %v150
    %v234 = vunpack.c.l.b16 %v151
    %v235 = vunpack.c.h.b16 %v151
    %v236 = vunpack.c.l.b16 %v152
    %v237 = vunpack.c.h.b16 %v152
    %v238 = vunpack.c.l.b16 %v153
    %v239 = vunpack.c.h.b16 %v153
    %v240 = vunpack.c.l.b16 %v154
    %v241 = vunpack.c.h.b16 %v154
    %v242 = vunpack.c.l.b16 %v155
    %v243 = vunpack.c.h.b16 %v155
    %v244 = vunpack.c.l.b16 %v156
    %v245 = vunpack.c.h.b16 %v156
    %v246 = vunpack.c.l.b16 %v157
    %v247 = vunpack.c.h.b16 %v157
    %v248 = vunpack.c.l.b16 %v158
    %v249 = vunpack.c.h.b16 %v158
    %v250 = vunpack.c.l.b16 %v159
    %v251 = vunpack.c.h.b16 %v159
    %v252 = vunpack.c.l.b16 %v160
    %v253 = vunpack.c.h.b16 %v160
    %v254 = vunpack.c.l.b16 %v161
    %v255 = vunpack.c.h.b16 %v161
    %v256 = vunpack.c.l.b16 %v162
    %v257 = vunpack.c.h.b16 %v162
    %v258 = vunpack.c.l.b16 %v163
    %v259 = vunpack.c.h.b16 %v163
    %v260 = vpack.c.b16 %v200, %v196
    %v261 = vpack.c.b16 %v201, %v197
    %v262 = vpack.c.b16 %v202, %v198
    %v263 = vpack.c.b16 %v203, %v199
    %v264 = vpack.c.b16 %v208, %v204
    %v265 = vpack.c.b16 %v209, %v205
    %v266 = vpack.c.b16 %v210, %v206
    %v267 = vpack.c.b16 %v211, %v207
    %v268 = vpack.c.b16 %v216, %v212
    %v269 = vpack.c.b16 %v217, %v213
    %v270 = vpack.c.b16 %v218, %v214
    %v271 = vpack.c.b16 %v219, %v215
    %v272 = vpack.c.b16 %v224, %v220
    %v273 = vpack.c.b16 %v225, %v221
    %v274 = vpack.c.b16 %v226, %v222
    %v275 = vpack.c.b16 %v227, %v223
    %v276 = vpack.c.b16 %v232, %v228
    %v277 = vpack.c.b16 %v233, %v229
    %v278 = vpack.c.b16 %v234, %v230
    %v279 = vpack.c.b16 %v235, %v231
    %v280 = vpack.c.b16 %v240, %v236
    %v281 = vpack.c.b16 %v241, %v237
    %v282 = vpack.c.b16 %v242, %v238
    %v283 = vpack.c.b16 %v243, %v239
    %v284 = vpack.c.b16 %v248, %v244
    %v285 = vpack.c.b16 %v249, %v245
    %v286 = vpack.c.b16 %v250, %v246
    %v287 = vpack.c.b16 %v251, %v247
    %v288 = vpack.c.b16 %v256, %v252
    %v289 = vpack.c.b16 %v257, %v253
    %v290 = vpack.c.b16 %v258, %v254
    %v291 = vpack.c.b16 %v259, %v255
    %324 = vmatprep.subr.bf16.mxu0 %v289
    %325 = vmatpush1.bf16.msra.mxu0 %v288
    %326 = vmatprep.subr.bf16.mxu0 %v285
    %327 = vmatpush1.bf16.msra.mxu0 %v284
    %328 = vmatprep.subr.bf16.mxu0 %v281
    %329 = vmatpush1.bf16.msra.mxu0 %v280
    %330 = vmatprep.subr.bf16.mxu0 %v277
    %331 = vmatpush1.bf16.msra.mxu0 %v276
    %332 = vmatprep.subr.bf16.mxu0 %v273
    %333 = vmatpush1.bf16.msra.mxu0 %v272
    %334 = vmatprep.subr.bf16.mxu0 %v269
    %335 = vmatpush1.bf16.msra.mxu0 %v268
    %336 = vmatprep.subr.bf16.mxu0 %v265
    %337 = vmatpush1.bf16.msra.mxu0 %v264
    %338 = vmatprep.subr.bf16.mxu0 %v261
    %339 = vmatpush1.bf16.msra.mxu0 %v260
    %340 = vmatprep.subr.bf16.mxu0 0
    %341 = vmatpush2.bf16.msra.mxu0 0
    %342 = vmatprep.subr.bf16.mxu0 0
    %343 = vmatpush2.bf16.msra.mxu0 0
    %344 = vmatprep.subr.bf16.mxu0 0
    %345 = vmatpush2.bf16.msra.mxu0 0
    %346 = vmatprep.subr.bf16.mxu0 0
    %347 = vmatpush2.bf16.msra.mxu0 0
    %348 = vmatprep.subr.bf16.mxu0 0
    %349 = vmatpush2.bf16.msra.mxu0 0
    %350 = vmatprep.subr.bf16.mxu0 0
    %351 = vmatpush2.bf16.msra.mxu0 0
    %352 = vmatprep.subr.bf16.mxu0 0
    %353 = vmatpush2.bf16.msra.mxu0 0
    %354 = vmatprep.subr.bf16.mxu0 0
    %355 = vmatpush2.bf16.msra.mxu0 0
    %356 = vmatprep.mubr.bf16.mxu0 0
    %357 = vmatmul.mubr.bf16.gmra.mxu0 %v131
    %v358 = vpop.f32.mrf.mxu0
    %v359 = vadd.f32 0.0, %v358
    %v360 = vpop.f32.mrf.mxu0
    %v361 = vadd.f32 0.0, %v360
    %v362 = vpop.f32.mrf.mxu0
    %v363 = vpop.f32.mrf.mxu0
    %364 = vdwg.mxu0
    %365 = vmatprep.subr.bf16.mxu0 %v291
    %366 = vmatpush1.bf16.msra.mxu0 %v290
    %367 = vmatprep.subr.bf16.mxu0 %v287
    %368 = vmatpush1.bf16.msra.mxu0 %v286
    %369 = vmatprep.subr.bf16.mxu0 %v283
    %370 = vmatpush1.bf16.msra.mxu0 %v282
    %371 = vmatprep.subr.bf16.mxu0 %v279
    %372 = vmatpush1.bf16.msra.mxu0 %v278
    %373 = vmatprep.subr.bf16.mxu0 %v275
    %374 = vmatpush1.bf16.msra.mxu0 %v274
    %375 = vmatprep.subr.bf16.mxu0 %v271
    %376 = vmatpush1.bf16.msra.mxu0 %v270
    %377 = vmatprep.subr.bf16.mxu0 %v267
    %378 = vmatpush1.bf16.msra.mxu0 %v266
    %379 = vmatprep.subr.bf16.mxu0 %v263
    %380 = vmatpush1.bf16.msra.mxu0 %v262
    %381 = vmatprep.subr.bf16.mxu0 0
    %382 = vmatpush2.bf16.msra.mxu0 0
    %383 = vmatprep.subr.bf16.mxu0 0
    %384 = vmatpush2.bf16.msra.mxu0 0
    %385 = vmatprep.subr.bf16.mxu0 0
    %386 = vmatpush2.bf16.msra.mxu0 0
    %387 = vmatprep.subr.bf16.mxu0 0
    %388 = vmatpush2.bf16.msra.mxu0 0
    %389 = vmatprep.subr.bf16.mxu0 0
    %390 = vmatpush2.bf16.msra.mxu0 0
    %391 = vmatprep.subr.bf16.mxu0 0
    %392 = vmatpush2.bf16.msra.mxu0 0
    %393 = vmatprep.subr.bf16.mxu0 0
    %394 = vmatpush2.bf16.msra.mxu0 0
    %395 = vmatprep.subr.bf16.mxu0 0
    %396 = vmatpush2.bf16.msra.mxu0 0
    %397 = vmatprep.mubr.bf16.mxu0 0
    %398 = vmatmul.mubr.bf16.gmra.mxu0 %v131
    %v399 = vpop.f32.mrf.mxu0
    %v400 = vadd.f32 0.0, %v399
    %v401 = vpop.f32.mrf.mxu0
    %v402 = vadd.f32 0.0, %v401
    %v403 = vpop.f32.mrf.mxu0
    %v404 = vpop.f32.mrf.mxu0
    %405 = vdwg.mxu0
    %v414 = vunpack.c.l.b16 %v123
    %v415 = vunpack.c.h.b16 %v123
    %v416 = vunpack.c.l.b16 %v124
    %v417 = vunpack.c.h.b16 %v124
    %v418 = vunpack.c.l.b16 %v125
    %v419 = vunpack.c.h.b16 %v125
    %v420 = vunpack.c.l.b16 %v126
    %v421 = vunpack.c.h.b16 %v126
    %v422 = vunpack.c.l.b16 %v127
    %v423 = vunpack.c.h.b16 %v127
    %v424 = vunpack.c.l.b16 %v128
    %v425 = vunpack.c.h.b16 %v128
    %v426 = vunpack.c.l.b16 %v129
    %v427 = vunpack.c.h.b16 %v129
    %v428 = vunpack.c.l.b16 %v130
    %v429 = vunpack.c.h.b16 %v130
    %v430 = vpack.c.b16 %v418, %v414
    %v431 = vpack.c.b16 %v419, %v415
    %v432 = vpack.c.b16 %v420, %v416
    %v433 = vpack.c.b16 %v421, %v417
    %v434 = vpack.c.b16 %v426, %v422
    %v435 = vpack.c.b16 %v427, %v423
    %v436 = vpack.c.b16 %v428, %v424
    %v437 = vpack.c.b16 %v429, %v425
    %vm446 = vcmask 261120
    %v448 = vsel %vm446, %v122, 0
    %450 = vmatprep.subr.bf16.mxu0 0
    %451 = vmatpush1.bf16.msra.mxu0 0
    %452 = vmatprep.subr.bf16.mxu0 0
    %453 = vmatpush1.bf16.msra.mxu0 0
    %454 = vmatprep.subr.bf16.mxu0 0
    %455 = vmatpush1.bf16.msra.mxu0 0
    %456 = vmatprep.subr.bf16.mxu0 0
    %457 = vmatpush1.bf16.msra.mxu0 0
    %458 = vmatprep.subr.bf16.mxu0 0
    %459 = vmatpush1.bf16.msra.mxu0 0
    %460 = vmatprep.subr.bf16.mxu0 0
    %461 = vmatpush1.bf16.msra.mxu0 0
    %462 = vmatprep.subr.bf16.mxu0 %v435
    %463 = vmatpush1.bf16.msra.mxu0 %v434
    %464 = vmatprep.subr.bf16.mxu0 %v431
    %465 = vmatpush1.bf16.msra.mxu0 %v430
    %466 = vmatprep.subr.bf16.mxu0 0
    %467 = vmatpush2.bf16.msra.mxu0 0
    %468 = vmatprep.subr.bf16.mxu0 0
    %469 = vmatpush2.bf16.msra.mxu0 0
    %470 = vmatprep.subr.bf16.mxu0 0
    %471 = vmatpush2.bf16.msra.mxu0 0
    %472 = vmatprep.subr.bf16.mxu0 0
    %473 = vmatpush2.bf16.msra.mxu0 0
    %474 = vmatprep.subr.bf16.mxu0 0
    %475 = vmatpush2.bf16.msra.mxu0 0
    %476 = vmatprep.subr.bf16.mxu0 0
    %477 = vmatpush2.bf16.msra.mxu0 0
    %478 = vmatprep.subr.bf16.mxu0 0
    %479 = vmatpush2.bf16.msra.mxu0 0
    %480 = vmatprep.subr.bf16.mxu0 0
    %481 = vmatpush2.bf16.msra.mxu0 0
    %482 = vmatprep.mubr.bf16.mxu0 0
    %483 = vmatmul.mubr.bf16.gmra.mxu0 %v448
    %v484 = vpop.f32.mrf.mxu0
    %v485 = vadd.f32 %v359, %v484
    %v486 = vpop.f32.mrf.mxu0
    %v487 = vadd.f32 %v361, %v486
    %v488 = vpop.f32.mrf.mxu0
    %v489 = vpop.f32.mrf.mxu0
    %490 = vdwg.mxu0
    %491 = vmatprep.subr.bf16.mxu0 0
    %492 = vmatpush1.bf16.msra.mxu0 0
    %493 = vmatprep.subr.bf16.mxu0 0
    %494 = vmatpush1.bf16.msra.mxu0 0
    %495 = vmatprep.subr.bf16.mxu0 0
    %496 = vmatpush1.bf16.msra.mxu0 0
    %497 = vmatprep.subr.bf16.mxu0 0
    %498 = vmatpush1.bf16.msra.mxu0 0
    %499 = vmatprep.subr.bf16.mxu0 0
    %500 = vmatpush1.bf16.msra.mxu0 0
    %501 = vmatprep.subr.bf16.mxu0 0
    %502 = vmatpush1.bf16.msra.mxu0 0
    %503 = vmatprep.subr.bf16.mxu0 %v437
    %504 = vmatpush1.bf16.msra.mxu0 %v436
    %505 = vmatprep.subr.bf16.mxu0 %v433
    %506 = vmatpush1.bf16.msra.mxu0 %v432
    %507 = vmatprep.subr.bf16.mxu0 0
    %508 = vmatpush2.bf16.msra.mxu0 0
    %509 = vmatprep.subr.bf16.mxu0 0
    %510 = vmatpush2.bf16.msra.mxu0 0
    %511 = vmatprep.subr.bf16.mxu0 0
    %512 = vmatpush2.bf16.msra.mxu0 0
    %513 = vmatprep.subr.bf16.mxu0 0
    %514 = vmatpush2.bf16.msra.mxu0 0
    %515 = vmatprep.subr.bf16.mxu0 0
    %516 = vmatpush2.bf16.msra.mxu0 0
    %517 = vmatprep.subr.bf16.mxu0 0
    %518 = vmatpush2.bf16.msra.mxu0 0
    %519 = vmatprep.subr.bf16.mxu0 0
    %520 = vmatpush2.bf16.msra.mxu0 0
    %521 = vmatprep.subr.bf16.mxu0 0
    %522 = vmatpush2.bf16.msra.mxu0 0
    %523 = vmatprep.mubr.bf16.mxu0 0
    %524 = vmatmul.mubr.bf16.gmra.mxu0 %v448
    %v525 = vpop.f32.mrf.mxu0
    %v526 = vadd.f32 %v400, %v525
    %v527 = vpop.f32.mrf.mxu0
    %v528 = vadd.f32 %v402, %v527
    %v529 = vpop.f32.mrf.mxu0
    %v530 = vpop.f32.mrf.mxu0
    %531 = vdwg.mxu0
    %v532 = vld [vmem:[%s5] sm:$0xf]
    %v534 = vlaneseq
    %v535 = vshrl.u32 %v534, 7
    %v536 = vsub.s32 0, %v535
    %v537 = vrot.slane %v532, %v536
    %v538 = vlaneseq
    %v539 = vshrl.u32 %v538, 7
    %v540 = vsub.s32 1, %v539
    %v541 = vrot.slane %v532, %v540
    %v542 = vlaneseq
    %v543 = vshrl.u32 %v542, 7
    %v544 = vsub.s32 2, %v543
    %v545 = vrot.slane %v532, %v544
    %v546 = vlaneseq
    %v547 = vshrl.u32 %v546, 7
    %v548 = vsub.s32 3, %v547
    %v549 = vrot.slane %v532, %v548
    %v554 = vadd.f32 %v485, %v537
    %v555 = vadd.f32 %v487, %v541
    %v556 = vadd.f32 %v526, %v545
    %v557 = vadd.f32 %v528, %v549
    %v558 = vmul.f32 %v554, 0.5
    %v559 = vtanh.pop %v558
    %v560 = vmul.f32 %v559, 0.5
    %v561 = vadd.f32 %v560, 0.5
    %v562 = vmul.f32 %v555, 0.5
    %v563 = vtanh.pop %v562
    %v564 = vmul.f32 %v563, 0.5
    %v565 = vadd.f32 %v564, 0.5
    %v566 = vtanh.pop %v556
    %v567 = vmul.f32 %v557, 0.5
    %v568 = vtanh.pop %v567
    %v569 = vmul.f32 %v568, 0.5
    %v570 = vadd.f32 %v569, 0.5
    %v571 = vmul.f32 %v565, %v121
    %v572 = vmul.f32 %v561, %v566
    %v573 = vadd.f32 %v571, %v572
    %v574 = vtanh.pop %v573
    %v575 = vmul.f32 %v570, %v574
    %v576 = vpack.c.bf16 %v575, %v575
    %v577 = vld [vmem:[#allocation11] sm:$0xf]
    %v578 = vld [vmem:[#allocation11 + $0x4] sm:$0xf]
    %v579 = vld [vmem:[#allocation11 + $0x8] sm:$0xf]
    %v580 = vld [vmem:[#allocation11 + $0xc] sm:$0xf]
    %v581 = vld [vmem:[#allocation11 + $0x10] sm:$0xf]
    %v582 = vld [vmem:[#allocation11 + $0x14] sm:$0xf]
    %v583 = vld [vmem:[#allocation11 + $0x18] sm:$0xf]
    %v584 = vld [vmem:[#allocation11 + $0x1c] sm:$0xf]
    %v585 = vld [vmem:[#allocation11 + $0x20] sm:$0xf]
    %v586 = vld [vmem:[#allocation11 + $0x24] sm:$0xf]
    %v587 = vld [vmem:[#allocation11 + $0x28] sm:$0xf]
    %v588 = vld [vmem:[#allocation11 + $0x2c] sm:$0xf]
    %v589 = vld [vmem:[#allocation11 + $0x30] sm:$0xf]
    %v590 = vld [vmem:[#allocation11 + $0x34] sm:$0xf]
    %v591 = vld [vmem:[#allocation11 + $0x38] sm:$0xf]
    %v592 = vld [vmem:[#allocation11 + $0x3c] sm:$0xf]
    %v593 = vld [vmem:[%s7] sm:$0x1]
    %v595 = vlaneseq
    %v596 = vshrl.u32 %v595, 7
    %v597 = vsub.s32 0, %v596
    %v598 = vrot.slane %v593, %v597
    %v616 = vunpack.c.l.b16 %v577
    %v617 = vunpack.c.l.b16 %v578
    %v618 = vunpack.c.l.b16 %v579
    %v619 = vunpack.c.l.b16 %v580
    %v620 = vunpack.c.l.b16 %v581
    %v621 = vunpack.c.l.b16 %v582
    %v622 = vunpack.c.l.b16 %v583
    %v623 = vunpack.c.l.b16 %v584
    %v624 = vunpack.c.l.b16 %v585
    %v625 = vunpack.c.l.b16 %v586
    %v626 = vunpack.c.l.b16 %v587
    %v627 = vunpack.c.l.b16 %v588
    %v628 = vunpack.c.l.b16 %v589
    %v629 = vunpack.c.l.b16 %v590
    %v630 = vunpack.c.l.b16 %v591
    %v631 = vunpack.c.l.b16 %v592
    %v632 = vpack.c.b16 %v617, %v616
    %v633 = vpack.c.b16 %v619, %v618
    %v634 = vpack.c.b16 %v621, %v620
    %v635 = vpack.c.b16 %v623, %v622
    %v636 = vpack.c.b16 %v625, %v624
    %v637 = vpack.c.b16 %v627, %v626
    %v638 = vpack.c.b16 %v629, %v628
    %v639 = vpack.c.b16 %v631, %v630
    %648 = vmatprep.subr.bf16.mxu0 0
    %649 = vmatpush1.bf16.msra.mxu0 %v639
    %650 = vmatprep.subr.bf16.mxu0 0
    %651 = vmatpush1.bf16.msra.mxu0 %v638
    %652 = vmatprep.subr.bf16.mxu0 0
    %653 = vmatpush1.bf16.msra.mxu0 %v637
    %654 = vmatprep.subr.bf16.mxu0 0
    %655 = vmatpush1.bf16.msra.mxu0 %v636
    %656 = vmatprep.subr.bf16.mxu0 0
    %657 = vmatpush1.bf16.msra.mxu0 %v635
    %658 = vmatprep.subr.bf16.mxu0 0
    %659 = vmatpush1.bf16.msra.mxu0 %v634
    %660 = vmatprep.subr.bf16.mxu0 0
    %661 = vmatpush1.bf16.msra.mxu0 %v633
    %662 = vmatprep.subr.bf16.mxu0 0
    %663 = vmatpush1.bf16.msra.mxu0 %v632
    %664 = vmatprep.subr.bf16.mxu0 0
    %665 = vmatpush2.bf16.msra.mxu0 0
    %666 = vmatprep.subr.bf16.mxu0 0
    %667 = vmatpush2.bf16.msra.mxu0 0
    %668 = vmatprep.subr.bf16.mxu0 0
    %669 = vmatpush2.bf16.msra.mxu0 0
    %670 = vmatprep.subr.bf16.mxu0 0
    %671 = vmatpush2.bf16.msra.mxu0 0
    %672 = vmatprep.subr.bf16.mxu0 0
    %673 = vmatpush2.bf16.msra.mxu0 0
    %674 = vmatprep.subr.bf16.mxu0 0
    %675 = vmatpush2.bf16.msra.mxu0 0
    %676 = vmatprep.subr.bf16.mxu0 0
    %677 = vmatpush2.bf16.msra.mxu0 0
    %678 = vmatprep.subr.bf16.mxu0 0
    %679 = vmatpush2.bf16.msra.mxu0 0
    %680 = vmatprep.mubr.bf16.mxu0 0
    %681 = vmatmul.mubr.bf16.gmra.mxu0 %v576
    %v682 = vpop.f32.mrf.mxu0
    %v683 = vadd.f32 %v598, %v682
    %v684 = vpop.f32.mrf.mxu0
    %v685 = vpop.f32.mrf.mxu0
    %v686 = vpop.f32.mrf.mxu0
    %687 = vdwg.mxu0
    %688 = vst [vmem:[#allocation13] sm:$0xff] %v683
    %689 = vst [vmem:[#allocation14] sm:$0xff] %v575
    %690 = vst [vmem:[#allocation16] sm:$0xff] %v573
    // Predicated region
    $region62: #{tpu_custom_call.1} parent=1 // pred_check
      _
    $region63: #{tpu_custom_call.1} parent=1 // pred_check_branch
      %692 = sbr.rel (0) target = $region65
    $region64: #{tpu_custom_call.1} parent=1 // pred_region
      %s694 = ssub.s32 128, 128
      %695 = vsyncadd [#allocation4], %s694
      %s697 = sshll.u32 [#allocation13], 4
      %s698 = int_to_ptr.vmem [resolvable:$true] %s697
      %700 = dma.vmem_to_hbm [thread:$0]  %s698, 128, %s8, [#allocation4]
    $region65: #{tpu_custom_call.1} parent=1 // pred_fallthru
      _
    // Predicated region
    $region66: #{tpu_custom_call.1} parent=1 // pred_check
      _
    $region67: #{tpu_custom_call.1} parent=1 // pred_check_branch
      %702 = sbr.rel (0) target = $region69
    $region68: #{tpu_custom_call.1} parent=1 // pred_region
      %s704 = ssub.s32 128, 128
      %705 = vsyncadd [#allocation15], %s704
      %s707 = sshll.u32 [#allocation14], 4
      %s708 = int_to_ptr.vmem [resolvable:$true] %s707
      %710 = dma.vmem_to_hbm [thread:$0]  %s708, 128, %s9, [#allocation15]
    $region69: #{tpu_custom_call.1} parent=1 // pred_fallthru
      _
    // Predicated region
    $region70: #{tpu_custom_call.1} parent=1 // pred_check
      _
    $region71: #{tpu_custom_call.1} parent=1 // pred_check_branch
      %712 = sbr.rel (0) target = $region73
    $region72: #{tpu_custom_call.1} parent=1 // pred_region
      %s714 = ssub.s32 128, 128
      %715 = vsyncadd [#allocation15], %s714
      %s717 = sshll.u32 [#allocation16], 4
      %s718 = int_to_ptr.vmem [resolvable:$true] %s717
      %720 = dma.vmem_to_hbm [thread:$0]  %s718, 128, %s10, [#allocation15]
    $region73: #{tpu_custom_call.1} parent=1 // pred_fallthru
      _
    // Predicated region
    $region74: #{tpu_custom_call.1} parent=1 // pred_check
      _
    $region75: #{tpu_custom_call.1} parent=1 // pred_check_branch
      %722 = sbr.rel (0) target = $region77
    $region76: #{tpu_custom_call.1} parent=1 // pred_region
      %723 = dma.done [#allocation4], 128
    $region77: #{tpu_custom_call.1} parent=1 // pred_fallthru
      _
    // Predicated region
    $region78: #{tpu_custom_call.1} parent=1 // pred_check
      _
    $region79: #{tpu_custom_call.1} parent=1 // pred_check_branch
      %725 = sbr.rel (0) target = $region81
    $region80: #{tpu_custom_call.1} parent=1 // pred_region
      %726 = dma.done [#allocation15], 128
    $region81: #{tpu_custom_call.1} parent=1 // pred_fallthru
      _
    // Predicated region
    $region82: #{tpu_custom_call.1} parent=1 // pred_check
      _
    $region83: #{tpu_custom_call.1} parent=1 // pred_check_branch
      %728 = sbr.rel (0) target = $region85
    $region84: #{tpu_custom_call.1} parent=1 // pred_region
      %729 = dma.done [#allocation15], 128
    $region85: #{tpu_custom_call.1} parent=1 // pred_fallthru
      _
    %730 = vsyncpa [#allocation3], 1
    %731 = vsyncpa [#allocation6], 1
    %732 = vsyncpa [#allocation9], 1
    %733 = vsyncpa [#allocation12], 1
    %734 = vsyncpa [#allocation4], 1
    %735 = vsyncpa [#allocation15], 1

</llo_original>
